<compile_context>
chip_gen: v5e
topology: v5e:2x2
jax: 0.10.0
libtpu: 0.0.40
codegen_flags: <defaults>
</compile_context>

<pallas_src>
import jax
import jax.numpy as jnp
from jax.experimental import pallas as pl
from jax.experimental.pallas import tpu as pltpu


def _round_up(x, m):
    return (x + m - 1) // m * m


def _vmem_capacity_bytes():
    try:
        return int(pltpu.get_tpu_info().vmem_capacity_bytes)
    except Exception:
        return 64 * 1024 * 1024  # conservative fallback (v7x per-TC VMEM)


def _choose_tiles(M, H, inter, out_itemsize, compute_itemsize, vmem_cap,
                  tm_req=None, tk_req=None):
    """Pick (tm, tk) so double-buffered tiles + f32 temporaries fit VMEM."""
    row_align = 16 if compute_itemsize == 2 else 8
    big_vmem = vmem_cap >= 100 * 1024 * 1024

    # Row tile: arithmetic intensity on streamed weight bytes is ~tm flop/byte,
    # so a large tm is what keeps big-M calls MXU-bound instead of HBM-bound.
    tm = tm_req if tm_req is not None else (1024 if big_vmem else 512)
    tm = max(row_align, min(tm, _round_up(M, row_align)))

    # Small-VMEM parts (v7x) have 2 TensorCores per chip: make sure the
    # "parallel" row axis has >= 2 blocks so the second core is not idle.
    if (not big_vmem) and M > 2 * row_align and _round_up(M, tm) <= tm:
        tm = _round_up(-(-M // 2), row_align)

    budget = int(vmem_cap * 0.75)

    def vmem_need(tm_, tk_):
        x_io = 2 * tm_ * H * compute_itemsize                  # x, 2 buffers
        wgt = 2 * (2 * tk_ * H + tk_ * H) * compute_itemsize   # wg + wd, 2 bufs
        out = 2 * tm_ * H * out_itemsize
        acc = tm_ * H * 4
        tmp = 3 * tm_ * tk_ * 4                                # gate/up/h f32
        return x_io + wgt + out + acc + tmp

    tk_cands = ([tk_req] if tk_req is not None
                else [1024, 768, 512, 384, 256, 128])
    while True:
        for cand in tk_cands:
            if cand and inter % cand == 0 and vmem_need(tm, cand) <= budget:
                return tm, cand
        if tm <= max(row_align, 128):
            break
        tm = max(_round_up(tm // 2, row_align), row_align)
    # Last resort (odd shapes / tiny VMEM): smallest legal intermediate tile.
    for cand in (128, 256):
        if inter % cand == 0:
            return tm, cand
    return tm, inter


def _swiglu_mlp_kernel(x_ref, wg_ref, wd_ref, o_ref, acc_ref):
    """One (row block i, intermediate block k) step of the SwiGLU MLP.

    x_ref:   (tm, H)     activations (compute dtype), resident across k
    wg_ref:  (2, H, tk)  gate ([0]) / up ([1]) columns of gate_proj.weight.T
    wd_ref:  (tk, H)     rows [k*tk, (k+1)*tk) of down_proj.weight.T
    o_ref:   (tm, H)     output tile, written at the last k step
    acc_ref: (tm, H)     f32 accumulator (VMEM scratch)
    """
    k = pl.program_id(1)
    x = x_ref[...]

    # Standard (M,K)x(K,N) contractions -> no in-kernel weight transposes.
    gate = jnp.dot(x, wg_ref[0], preferred_element_type=jnp.float32)
    up = jnp.dot(x, wg_ref[1], preferred_element_type=jnp.float32)
    # SiLU + gating in f32 (EUP sigmoid + VPU muls).
    h = (gate * jax.nn.sigmoid(gate)) * up

    down = jnp.dot(h.astype(wd_ref.dtype), wd_ref[...],
                   preferred_element_type=jnp.float32)

    @pl.when(k == 0)
    def _():
        acc_ref[...] = down          # direct store: no zero-init + RMW at k==0

    @pl.when(k > 0)
    def _():
        acc_ref[...] += down

    @pl.when(k == pl.num_programs(1) - 1)
    def _():
        o_ref[...] = acc_ref[...].astype(o_ref.dtype)


def prepare_retnet_mlp_weights(gate_proj_weight, down_proj_weight,
                               compute_dtype=jnp.bfloat16):
    """One-time weight prep (do this at parameter-load time, not per call).

    gate_proj_weight: (2*I, H)  torch-layout gate_proj.weight
    down_proj_weight: (H, I)    torch-layout down_proj.weight
    Returns:
      wg_p: (2, H, I)  [0] = gate columns, [1] = up columns (compute dtype)
      wd_p: (I, H)     down_proj.weight.T (compute dtype)
    """
    two_i, H = gate_proj_weight.shape
    inter = two_i // 2
    assert down_proj_weight.shape == (H, inter)
    wg_p = jnp.transpose(gate_proj_weight.reshape(2, inter, H),
                         (0, 2, 1)).astype(compute_dtype)
    wd_p = jnp.transpose(down_proj_weight, (1, 0)).astype(compute_dtype)
    return wg_p, wd_p


def retnet_mlp_forward(x, wg_p, wd_p, *, tm=None, tk=None,
                       compute_dtype=jnp.bfloat16):
    """RetNetMLP forward.

    x:    (B, S, H) activations.
    wg_p: (2, H, I) prepared gate/up weights (prepare_retnet_mlp_weights).
    wd_p: (I, H)    prepared down-proj weights.
    """
    B, S, H = x.shape
    assert wg_p.ndim == 3 and wg_p.shape[0] == 2 and wg_p.shape[1] == H
    inter = wg_p.shape[2]
    assert wd_p.shape == (inter, H)

    M = B * S
    out_dtype = x.dtype
    compute_itemsize = jnp.dtype(compute_dtype).itemsize
    out_itemsize = jnp.dtype(out_dtype).itemsize

    vmem_cap = _vmem_capacity_bytes()
    tm, tk = _choose_tiles(M, H, inter, out_itemsize, compute_itemsize,
                           vmem_cap, tm_req=tm, tk_req=tk)
    M_pad = _round_up(M, tm)
    num_k = inter // tk
    n_row_blocks = M_pad // tm

    x2d = x.reshape(M, H)
    if M_pad != M:
        x2d = jnp.pad(x2d, ((0, M_pad - M), (0, 0)))
    # Only the activations are cast per call (cheap vs. weights); the prepared
    # weights are already in the compute dtype, so these are no-ops.
    x_c = x2d.astype(compute_dtype)
    wg_c = wg_p.astype(compute_dtype)
    wd_c = wd_p.astype(compute_dtype)

    cost = pl.CostEstimate(
        flops=6 * M_pad * inter * H,        # gate + up + down matmuls
        transcendentals=M_pad * inter,      # sigmoid
        bytes_accessed=(
            M_pad * H * compute_itemsize
            + (wg_c.size + wd_c.size) * compute_itemsize * n_row_blocks
            + M_pad * H * out_itemsize),
    )

    # TODO(synk): store weights in int8 (v5e/v6e) / fp8 (v7x) to halve streamed
    # weight bytes in the memory-bound small-M (decode) regime.
    # TODO(synk): optionally sweep pipeline_mode=pl.Buffered(3) on the weight
    # BlockSpecs on 128 MiB-VMEM parts (v5e/v6e).
    # TODO(synk): for sub-128 H (toy configs), pad/batch H to a multiple of 128
    # before calling so output stores are lane-dense.
    out = pl.pallas_call(
        _swiglu_mlp_kernel,
        out_shape=jax.ShapeDtypeStruct((M_pad, H), out_dtype),
        grid_spec=pltpu.PrefetchScalarGridSpec(
            num_scalar_prefetch=0,
            grid=(n_row_blocks, num_k),
            in_specs=[
                # activation rows: change with i only (resident across k)
                pl.BlockSpec((tm, H), lambda i, k: (i, 0)),
                # fused gate/up weight columns [k*tk, (k+1)*tk)
                pl.BlockSpec((2, H, tk), lambda i, k: (0, 0, k)),
                # down-proj rows [k*tk, (k+1)*tk) of Wd.T
                pl.BlockSpec((tk, H), lambda i, k: (k, 0)),
            ],
            out_specs=pl.BlockSpec((tm, H), lambda i, k: (i, 0)),
            scratch_shapes=[pltpu.VMEM((tm, H), jnp.float32)],
        ),
        compiler_params=pltpu.CompilerParams(
            dimension_semantics=("parallel", "arbitrary"),
            vmem_limit_bytes=int(vmem_cap * 0.75),
        ),
        cost_estimate=cost,
    )(x_c, wg_c, wd_c)

    return out[:M].reshape(B, S, H)


def _reference(x, wg, wd):
    y = jnp.einsum("bsh,oh->bso", x, wg)
    inter = wg.shape[0] // 2
    gate, up = y[..., :inter], y[..., inter:]
    h = gate * jax.nn.sigmoid(gate) * up
    return jnp.einsum("bsi,hi->bsh", h, wd)


if __name__ == "__main__":
    # Module config: hidden_size=32, hidden_ratio=4 (default)
    #   intermediate_size = int(32*4*2/3)=85 -> rounded up to 256
    hidden_size = 32
    intermediate_size = 256 * ((int(hidden_size * 4 * 2 / 3) + 255) // 256)  # 256

    B, S = 2, 8
    key = jax.random.PRNGKey(0)
    kx, kg, kd = jax.random.split(key, 3)

    x = jax.random.normal(kx, (B, S, hidden_size), dtype=jnp.float32)
    # Deterministic synthetic weights (same shapes as the nn.Linear params).
    wg = jax.random.normal(kg, (2 * intermediate_size, hidden_size),
                           dtype=jnp.float32) * 0.05   # gate_proj.weight
    wd = jax.random.normal(kd, (hidden_size, intermediate_size),
                           dtype=jnp.float32) * 0.05   # down_proj.weight

    # One-time prep (in production this happens once at parameter-load time).
    wg_p, wd_p = prepare_retnet_mlp_weights(wg, wd)

    out = retnet_mlp_forward(x, wg_p, wd_p)
    out = jax.block_until_ready(out)

    ref = _reference(x, wg, wd)
    assert out.shape == (B, S, hidden_size)
    # bf16 MXU inputs with f32 accumulation -> loosened tolerance vs f32 ref.
    assert jnp.allclose(out, ref, atol=1e-2, rtol=5e-2), (
        "mismatch vs reference, max abs err = "
        f"{jnp.max(jnp.abs(out - ref))}")

    print("KERNEL_OK")
</pallas_src>

<mosaic_0001>
module attributes {stable_mosaic.version = 11 : i64} {
  func.func @_swiglu_mlp_kernel(%arg0: i32, %arg1: i32, %arg2: memref<16x32xbf16, #tpu.memory_space<vmem>>, %arg3: memref<2x32x256xbf16, #tpu.memory_space<vmem>>, %arg4: memref<256x32xbf16, #tpu.memory_space<vmem>>, %arg5: memref<16x32xf32, #tpu.memory_space<vmem>>, %arg6: memref<16x32xf32, #tpu.memory_space<vmem>>) attributes {dimension_semantics = [#tpu.dimension_semantics<parallel>, #tpu.dimension_semantics<arbitrary>], iteration_bounds = array<i64: 1, 1>, scalar_prefetch = 0 : i64, scratch_operands = 1 : i64, tpu.core_type = #tpu.core_type<tc>, window_params = [{transform_indices = @transform_0, window_bounds = array<i64: 16, 32>}, {transform_indices = @transform_1, window_bounds = array<i64: 2, 32, 256>}, {transform_indices = @transform_2, window_bounds = array<i64: 256, 32>}, {transform_indices = @transform_3, window_bounds = array<i64: 16, 32>}]} {
    %c0 = arith.constant 0 : index
    %c0_0 = arith.constant 0 : index
    %0 = vector.load %arg2[%c0, %c0_0] : memref<16x32xbf16, #tpu.memory_space<vmem>>, vector<16x32xbf16>
    %c0_1 = arith.constant 0 : index
    %c0_2 = arith.constant 0 : index
    %c0_3 = arith.constant 0 : index
    %1 = vector.load %arg3[%c0_1, %c0_2, %c0_3] : memref<2x32x256xbf16, #tpu.memory_space<vmem>>, vector<1x32x256xbf16>
    %2 = vector.shape_cast %1 : vector<1x32x256xbf16> to vector<32x256xbf16>
    %cst = arith.constant dense<0.000000e+00> : vector<16x256xf32>
    %3 = tpu.matmul %0, %2, %cst {dimension_numbers = #tpu.dot_dimension_numbers<[1], [0], [0], [1], [0, 0, 1, 1], [], []>} : vector<16x32xbf16>, vector<32x256xbf16>, vector<16x256xf32> -> vector<16x256xf32>
    %c1 = arith.constant 1 : index
    %c0_4 = arith.constant 0 : index
    %c0_5 = arith.constant 0 : index
    %4 = vector.load %arg3[%c1, %c0_4, %c0_5] : memref<2x32x256xbf16, #tpu.memory_space<vmem>>, vector<1x32x256xbf16>
    %5 = vector.shape_cast %4 : vector<1x32x256xbf16> to vector<32x256xbf16>
    %cst_6 = arith.constant dense<0.000000e+00> : vector<16x256xf32>
    %6 = tpu.matmul %0, %5, %cst_6 {dimension_numbers = #tpu.dot_dimension_numbers<[1], [0], [0], [1], [0, 0, 1, 1], [], []>} : vector<16x32xbf16>, vector<32x256xbf16>, vector<16x256xf32> -> vector<16x256xf32>
    %7 = arith.negf %3 : vector<16x256xf32>
    %8 = math.exp %7 : vector<16x256xf32>
    %cst_7 = arith.constant 1.000000e+00 : f32
    %9 = vector.broadcast %cst_7 : f32 to vector<16x256xf32>
    %10 = arith.addf %9, %8 : vector<16x256xf32>
    %11 = arith.divf %9, %10 : vector<16x256xf32>
    %12 = arith.mulf %3, %11 : vector<16x256xf32>
    %13 = arith.mulf %12, %6 : vector<16x256xf32>
    %14 = arith.truncf %13 : vector<16x256xf32> to vector<16x256xbf16>
    %c0_8 = arith.constant 0 : index
    %c0_9 = arith.constant 0 : index
    %15 = vector.load %arg4[%c0_8, %c0_9] : memref<256x32xbf16, #tpu.memory_space<vmem>>, vector<256x32xbf16>
    %cst_10 = arith.constant dense<0.000000e+00> : vector<16x32xf32>
    %16 = tpu.matmul %14, %15, %cst_10 {dimension_numbers = #tpu.dot_dimension_numbers<[1], [0], [0], [1], [0, 0, 1, 1], [], []>} : vector<16x256xbf16>, vector<256x32xbf16>, vector<16x32xf32> -> vector<16x32xf32>
    %c0_i32 = arith.constant 0 : i32
    %17 = arith.cmpi eq, %arg1, %c0_i32 : i32
    %18 = arith.extui %17 : i1 to i32
    %c0_i32_11 = arith.constant 0 : i32
    %19 = arith.cmpi ne, %18, %c0_i32_11 : i32
    scf.if %19 {
      %c0_16 = arith.constant 0 : index
      %c0_17 = arith.constant 0 : index
      %26 = vector.load %arg6[%c0_16, %c0_17] : memref<16x32xf32, #tpu.memory_space<vmem>>, vector<16x32xf32>
      tpu.vector_store %arg6[%c0_16, %c0_17], %16 {strides = array<i32>} : memref<16x32xf32, #tpu.memory_space<vmem>>, vector<16x32xf32>,
    } else {
    }
    %c0_i32_12 = arith.constant 0 : i32
    %20 = arith.cmpi sgt, %arg1, %c0_i32_12 : i32
    %21 = arith.extui %20 : i1 to i32
    %c0_i32_13 = arith.constant 0 : i32
    %22 = arith.cmpi ne, %21, %c0_i32_13 : i32
    scf.if %22 {
      %c0_16 = arith.constant 0 : index
      %c0_17 = arith.constant 0 : index
      %26 = vector.load %arg6[%c0_16, %c0_17] : memref<16x32xf32, #tpu.memory_space<vmem>>, vector<16x32xf32>
      %27 = arith.addf %26, %16 : vector<16x32xf32>
      %c0_18 = arith.constant 0 : index
      %c0_19 = arith.constant 0 : index
      %28 = vector.load %arg6[%c0_18, %c0_19] : memref<16x32xf32, #tpu.memory_space<vmem>>, vector<16x32xf32>
      tpu.vector_store %arg6[%c0_18, %c0_19], %27 {strides = array<i32>} : memref<16x32xf32, #tpu.memory_space<vmem>>, vector<16x32xf32>,
    } else {
    }
    %c0_i32_14 = arith.constant 0 : i32
    %23 = arith.cmpi eq, %arg1, %c0_i32_14 : i32
    %24 = arith.extui %23 : i1 to i32
    %c0_i32_15 = arith.constant 0 : i32
    %25 = arith.cmpi ne, %24, %c0_i32_15 : i32
    scf.if %25 {
      %c0_16 = arith.constant 0 : index
      %c0_17 = arith.constant 0 : index
      %26 = vector.load %arg6[%c0_16, %c0_17] : memref<16x32xf32, #tpu.memory_space<vmem>>, vector<16x32xf32>
      %c0_18 = arith.constant 0 : index
      %c0_19 = arith.constant 0 : index
      %27 = vector.load %arg5[%c0_18, %c0_19] : memref<16x32xf32, #tpu.memory_space<vmem>>, vector<16x32xf32>
      tpu.vector_store %arg5[%c0_18, %c0_19], %26 {strides = array<i32>} : memref<16x32xf32, #tpu.memory_space<vmem>>, vector<16x32xf32>,
    } else {
    }
    return
  }
  func.func @transform_0(%arg0: i32, %arg1: i32) -> (i32, i32) {
    %c0_i32 = arith.constant 0 : i32
    %c0_i32_0 = arith.constant 0 : i32
    return %arg0, %c0_i32 : i32, i32
  }
  func.func @transform_1(%arg0: i32, %arg1: i32) -> (i32, i32, i32) {
    %c0_i32 = arith.constant 0 : i32
    %c0_i32_0 = arith.constant 0 : i32
    %c0_i32_1 = arith.constant 0 : i32
    return %c0_i32, %c0_i32_0, %arg1 : i32, i32, i32
  }
  func.func @transform_2(%arg0: i32, %arg1: i32) -> (i32, i32) {
    %c0_i32 = arith.constant 0 : i32
    %c0_i32_0 = arith.constant 0 : i32
    return %arg1, %c0_i32 : i32, i32
  }
  func.func @transform_3(%arg0: i32, %arg1: i32) -> (i32, i32) {
    %c0_i32 = arith.constant 0 : i32
    %c0_i32_0 = arith.constant 0 : i32
    return %arg0, %c0_i32 : i32, i32
  }
}

</mosaic_0001>

<llo_original>
// kernel: tpu_custom_call.1
$region0: #{tpu_custom_call.1}
  #allocation0 [shape = 'u32[]', space=smem, size = 0x4, offset = 0x4, fixed_abs, tag = 'smem constant byte address 0x4 - core index']
  #allocation1 [shape = 'u32[72,128]{1,0:T(1,128)}', space=vmem, size = 0x9000, scoped, tag = 'internal scratch']
  #allocation2 [shape = 'f32[16,32]{1,0:T(8,128)}', space=vmem, size = 0x2000, scoped, tag = 'scratch operand']
  %s0 = inlined_call_operand.vmem [shape: bf16[16,32], index: 0, kind: input, shape index: {}]
  %s1 = inlined_call_operand.vmem [shape: bf16[2,32,256], index: 1, kind: input, shape index: {}]
  %s2 = inlined_call_operand.vmem [shape: bf16[256,32], index: 2, kind: input, shape index: {}]
  %s3 = inlined_call_operand.hbm [shape: f32[16,32], index: 3, kind: output, shape index: {}]
  %s4 = sld [smem:[#allocation0]]
  $region34: #{tpu_custom_call.1} parent=0
    _
  %s6 = ssub.s32 1, %s4
  %s7 = scalar_select 0, %s6, %s4
  $region1: #{tpu_custom_call.1} parent=0
    #allocation3 [shape = 'u8[8192]{0}', space=vmem, size = 0x2000, scoped, tag = 'output window, operand 0, single buffered']
    #allocation4 [shape = 's32[1]{0}', space=sflag, size = 0x4, scoped, tag = 'scoped memory for tpu_custom_call.1']
    %8 = vsyncpa [#allocation4], 0
    // Predicated region
    $region2: #{tpu_custom_call.1} parent=1 // pred_check
      _
    $region3: #{tpu_custom_call.1} parent=1 // pred_check_branch
      %10 = sbr.rel (0) target = $region5
    $region4: #{tpu_custom_call.1} parent=1 // pred_region
      _
    $region5: #{tpu_custom_call.1} parent=1 // pred_fallthru
      _
    // Predicated region
    $region6: #{tpu_custom_call.1} parent=1 // pred_check
      _
    $region7: #{tpu_custom_call.1} parent=1 // pred_check_branch
      %12 = sbr.rel (0) target = $region9
    $region8: #{tpu_custom_call.1} parent=1 // pred_region
      _
    $region9: #{tpu_custom_call.1} parent=1 // pred_fallthru
      _
    // Predicated region
    $region10: #{tpu_custom_call.1} parent=1 // pred_check
      _
    $region11: #{tpu_custom_call.1} parent=1 // pred_check_branch
      %14 = sbr.rel (0) target = $region13
    $region12: #{tpu_custom_call.1} parent=1 // pred_region
      _
    $region13: #{tpu_custom_call.1} parent=1 // pred_fallthru
      _
    %v16 = vld [vmem:[%s0] sm:$0xf]
    %v17 = vld [vmem:[%s0 + $0x4] sm:$0xf]
    %v18 = vld [vmem:[%s1] sm:$0xff]
    %v19 = vld [vmem:[%s1 + $0x8] sm:$0xff]
    %v20 = vld [vmem:[%s1 + $0x10] sm:$0xff]
    %v21 = vld [vmem:[%s1 + $0x18] sm:$0xff]
    %v24 = vunpack.c.l.b16 %v16
    %v25 = vunpack.c.l.b16 %v17
    %v26 = vpack.c.b16 %v25, %v24
    %v31 = vunpack.c.l.b16 %v18
    %v32 = vunpack.c.h.b16 %v18
    %v33 = vunpack.c.l.b16 %v19
    %v34 = vunpack.c.h.b16 %v19
    %v35 = vunpack.c.l.b16 %v20
    %v36 = vunpack.c.h.b16 %v20
    %v37 = vunpack.c.l.b16 %v21
    %v38 = vunpack.c.h.b16 %v21
    %v39 = vpack.c.b16 %v33, %v31
    %v40 = vpack.c.b16 %v34, %v32
    %v41 = vpack.c.b16 %v37, %v35
    %v42 = vpack.c.b16 %v38, %v36
    %vm47 = vcmask 261120
    %v49 = vsel %vm47, %v26, 0
    %51 = vmatpush.bf16.msra.mxu0 0
    %52 = vmatpush.bf16.msra.mxu0 0
    %53 = vmatpush.bf16.msra.mxu0 0
    %54 = vmatpush.bf16.msra.mxu0 0
    %55 = vmatpush.bf16.msra.mxu0 0
    %56 = vmatpush.bf16.msra.mxu0 0
    %57 = vmatpush.bf16.msra.mxu0 %v41
    %58 = vmatpush.bf16.msra.mxu0 %v39
    %59 = vmatmul.bf16.gmra.mxu0 %v49
    %v60 = vpop.f32.mrf.mxu0
    %v61 = vadd.f32 0.0, %v60
    %v62 = vpop.f32.mrf.mxu0
    %v63 = vadd.f32 0.0, %v62
    %64 = vdwg.mxu0
    %65 = vmatpush.bf16.msra.mxu0 0
    %66 = vmatpush.bf16.msra.mxu0 0
    %67 = vmatpush.bf16.msra.mxu0 0
    %68 = vmatpush.bf16.msra.mxu0 0
    %69 = vmatpush.bf16.msra.mxu0 0
    %70 = vmatpush.bf16.msra.mxu0 0
    %71 = vmatpush.bf16.msra.mxu0 %v42
    %72 = vmatpush.bf16.msra.mxu0 %v40
    %73 = vmatmul.bf16.gmra.mxu0 %v49
    %v74 = vpop.f32.mrf.mxu0
    %v75 = vadd.f32 0.0, %v74
    %v76 = vpop.f32.mrf.mxu0
    %v77 = vadd.f32 0.0, %v76
    %78 = vdwg.mxu0
    %s79 = scalar_lea.vmem %s1, 32
    %v80 = vld [vmem:[%s79] sm:$0xff]
    %v81 = vld [vmem:[%s79 + $0x8] sm:$0xff]
    %v82 = vld [vmem:[%s79 + $0x10] sm:$0xff]
    %v83 = vld [vmem:[%s79 + $0x18] sm:$0xff]
    %v88 = vunpack.c.l.b16 %v80
    %v89 = vunpack.c.h.b16 %v80
    %v90 = vunpack.c.l.b16 %v81
    %v91 = vunpack.c.h.b16 %v81
    %v92 = vunpack.c.l.b16 %v82
    %v93 = vunpack.c.h.b16 %v82
    %v94 = vunpack.c.l.b16 %v83
    %v95 = vunpack.c.h.b16 %v83
    %v96 = vpack.c.b16 %v90, %v88
    %v97 = vpack.c.b16 %v91, %v89
    %v98 = vpack.c.b16 %v94, %v92
    %v99 = vpack.c.b16 %v95, %v93
    %104 = vmatpush.bf16.msra.mxu0 0
    %105 = vmatpush.bf16.msra.mxu0 0
    %106 = vmatpush.bf16.msra.mxu0 0
    %107 = vmatpush.bf16.msra.mxu0 0
    %108 = vmatpush.bf16.msra.mxu0 0
    %109 = vmatpush.bf16.msra.mxu0 0
    %110 = vmatpush.bf16.msra.mxu0 %v98
    %111 = vmatpush.bf16.msra.mxu0 %v96
    %112 = vmatmul.bf16.gmra.mxu0 %v49
    %v113 = vpop.f32.mrf.mxu0
    %v114 = vadd.f32 0.0, %v113
    %v115 = vpop.f32.mrf.mxu0
    %v116 = vadd.f32 0.0, %v115
    %117 = vdwg.mxu0
    %118 = vmatpush.bf16.msra.mxu0 0
    %119 = vmatpush.bf16.msra.mxu0 0
    %120 = vmatpush.bf16.msra.mxu0 0
    %121 = vmatpush.bf16.msra.mxu0 0
    %122 = vmatpush.bf16.msra.mxu0 0
    %123 = vmatpush.bf16.msra.mxu0 0
    %124 = vmatpush.bf16.msra.mxu0 %v99
    %125 = vmatpush.bf16.msra.mxu0 %v97
    %126 = vmatmul.bf16.gmra.mxu0 %v49
    %v127 = vpop.f32.mrf.mxu0
    %v128 = vadd.f32 0.0, %v127
    %v129 = vpop.f32.mrf.mxu0
    %v130 = vadd.f32 0.0, %v129
    %131 = vdwg.mxu0
    %v132 = vxor.u32 %v61, 2147483648
    %v133 = vxor.u32 %v75, 2147483648
    %v134 = vxor.u32 %v63, 2147483648
    %v135 = vxor.u32 %v77, 2147483648
    %v136 = vmul.f32 %v132, 1.442695
    %v137 = vpow.pop %v136
    %v138 = vmul.f32 %v133, 1.442695
    %v139 = vpow.pop %v138
    %v140 = vmul.f32 %v134, 1.442695
    %v141 = vpow.pop %v140
    %v142 = vmul.f32 %v135, 1.442695
    %v143 = vpow.pop %v142
    %v144 = vadd.f32 %v137, 1.0
    %v145 = vadd.f32 %v139, 1.0
    %v146 = vadd.f32 %v141, 1.0
    %v147 = vadd.f32 %v143, 1.0
    %v148 = vrcp.pop %v144
    %v149 = vmul.f32 %v144, %v148
    %v150 = vsub.f32 1.0, %v149
    %v151 = vmul.f32 %v148, %v150
    %v152 = vadd.f32 %v148, %v151
    %vm153 = vweird.f32 %v144
    %vm154 = vweird.f32 %v148
    %vm155 = vmor %vm153, %vm154
    %v156 = vsel %vm155, %v148, %v152
    %v157 = vand.u32 2147483647, %v144
    %vm158 = vcmp.eq.f32.partialorder %v157, 8.507059e+37
    %v159 = vand.u32 %v144, 2147483648
    %v160 = vor.u32 1.1754944e-38, %v159
    %v161 = vsel %vm158, %v160, %v156
    %v162 = vmul.f32 1.0, %v161
    %v163 = vrcp.pop %v145
    %v164 = vmul.f32 %v145, %v163
    %v165 = vsub.f32 1.0, %v164
    %v166 = vmul.f32 %v163, %v165
    %v167 = vadd.f32 %v163, %v166
    %vm168 = vweird.f32 %v145
    %vm169 = vweird.f32 %v163
    %vm170 = vmor %vm168, %vm169
    %v171 = vsel %vm170, %v163, %v167
    %v172 = vand.u32 2147483647, %v145
    %vm173 = vcmp.eq.f32.partialorder %v172, 8.507059e+37
    %v174 = vand.u32 %v145, 2147483648
    %v175 = vor.u32 1.1754944e-38, %v174
    %v176 = vsel %vm173, %v175, %v171
    %v177 = vmul.f32 1.0, %v176
    %v178 = vrcp.pop %v146
    %v179 = vmul.f32 %v146, %v178
    %v180 = vsub.f32 1.0, %v179
    %v181 = vmul.f32 %v178, %v180
    %v182 = vadd.f32 %v178, %v181
    %vm183 = vweird.f32 %v146
    %vm184 = vweird.f32 %v178
    %vm185 = vmor %vm183, %vm184
    %v186 = vsel %vm185, %v178, %v182
    %v187 = vand.u32 2147483647, %v146
    %vm188 = vcmp.eq.f32.partialorder %v187, 8.507059e+37
    %v189 = vand.u32 %v146, 2147483648
    %v190 = vor.u32 1.1754944e-38, %v189
    %v191 = vsel %vm188, %v190, %v186
    %v192 = vmul.f32 1.0, %v191
    %v193 = vrcp.pop %v147
    %v194 = vmul.f32 %v147, %v193
    %v195 = vsub.f32 1.0, %v194
    %v196 = vmul.f32 %v193, %v195
    %v197 = vadd.f32 %v193, %v196
    %vm198 = vweird.f32 %v147
    %vm199 = vweird.f32 %v193
    %vm200 = vmor %vm198, %vm199
    %v201 = vsel %vm200, %v193, %v197
    %v202 = vand.u32 2147483647, %v147
    %vm203 = vcmp.eq.f32.partialorder %v202, 8.507059e+37
    %v204 = vand.u32 %v147, 2147483648
    %v205 = vor.u32 1.1754944e-38, %v204
    %v206 = vsel %vm203, %v205, %v201
    %v207 = vmul.f32 1.0, %v206
    %v208 = vmul.f32 %v61, %v162
    %v209 = vmul.f32 %v75, %v177
    %v210 = vmul.f32 %v63, %v192
    %v211 = vmul.f32 %v77, %v207
    %v212 = vmul.f32 %v208, %v114
    %v213 = vmul.f32 %v209, %v128
    %v214 = vmul.f32 %v210, %v116
    %v215 = vmul.f32 %v211, %v130
    %v216 = vpack.c.bf16 %v214, %v212
    %v217 = vpack.c.bf16 %v215, %v213
    %v218 = vld [vmem:[%s2] sm:$0xf]
    %v219 = vld [vmem:[%s2 + $0x4] sm:$0xf]
    %v220 = vld [vmem:[%s2 + $0x8] sm:$0xf]
    %v221 = vld [vmem:[%s2 + $0xc] sm:$0xf]
    %v222 = vld [vmem:[%s2 + $0x10] sm:$0xf]
    %v223 = vld [vmem:[%s2 + $0x14] sm:$0xf]
    %v224 = vld [vmem:[%s2 + $0x18] sm:$0xf]
    %v225 = vld [vmem:[%s2 + $0x1c] sm:$0xf]
    %v226 = vld [vmem:[%s2 + $0x20] sm:$0xf]
    %v227 = vld [vmem:[%s2 + $0x24] sm:$0xf]
    %v228 = vld [vmem:[%s2 + $0x28] sm:$0xf]
    %v229 = vld [vmem:[%s2 + $0x2c] sm:$0xf]
    %v230 = vld [vmem:[%s2 + $0x30] sm:$0xf]
    %v231 = vld [vmem:[%s2 + $0x34] sm:$0xf]
    %v232 = vld [vmem:[%s2 + $0x38] sm:$0xf]
    %v233 = vld [vmem:[%s2 + $0x3c] sm:$0xf]
    %v234 = vld [vmem:[%s2 + $0x40] sm:$0xf]
    %v235 = vld [vmem:[%s2 + $0x44] sm:$0xf]
    %v236 = vld [vmem:[%s2 + $0x48] sm:$0xf]
    %v237 = vld [vmem:[%s2 + $0x4c] sm:$0xf]
    %v238 = vld [vmem:[%s2 + $0x50] sm:$0xf]
    %v239 = vld [vmem:[%s2 + $0x54] sm:$0xf]
    %v240 = vld [vmem:[%s2 + $0x58] sm:$0xf]
    %v241 = vld [vmem:[%s2 + $0x5c] sm:$0xf]
    %v242 = vld [vmem:[%s2 + $0x60] sm:$0xf]
    %v243 = vld [vmem:[%s2 + $0x64] sm:$0xf]
    %v244 = vld [vmem:[%s2 + $0x68] sm:$0xf]
    %v245 = vld [vmem:[%s2 + $0x6c] sm:$0xf]
    %v246 = vld [vmem:[%s2 + $0x70] sm:$0xf]
    %v247 = vld [vmem:[%s2 + $0x74] sm:$0xf]
    %v248 = vld [vmem:[%s2 + $0x78] sm:$0xf]
    %v249 = vld [vmem:[%s2 + $0x7c] sm:$0xf]
    %v282 = vunpack.c.l.b16 %v218
    %v283 = vunpack.c.l.b16 %v219
    %v284 = vunpack.c.l.b16 %v220
    %v285 = vunpack.c.l.b16 %v221
    %v286 = vunpack.c.l.b16 %v222
    %v287 = vunpack.c.l.b16 %v223
    %v288 = vunpack.c.l.b16 %v224
    %v289 = vunpack.c.l.b16 %v225
    %v290 = vunpack.c.l.b16 %v226
    %v291 = vunpack.c.l.b16 %v227
    %v292 = vunpack.c.l.b16 %v228
    %v293 = vunpack.c.l.b16 %v229
    %v294 = vunpack.c.l.b16 %v230
    %v295 = vunpack.c.l.b16 %v231
    %v296 = vunpack.c.l.b16 %v232
    %v297 = vunpack.c.l.b16 %v233
    %v298 = vunpack.c.l.b16 %v234
    %v299 = vunpack.c.l.b16 %v235
    %v300 = vunpack.c.l.b16 %v236
    %v301 = vunpack.c.l.b16 %v237
    %v302 = vunpack.c.l.b16 %v238
    %v303 = vunpack.c.l.b16 %v239
    %v304 = vunpack.c.l.b16 %v240
    %v305 = vunpack.c.l.b16 %v241
    %v306 = vunpack.c.l.b16 %v242
    %v307 = vunpack.c.l.b16 %v243
    %v308 = vunpack.c.l.b16 %v244
    %v309 = vunpack.c.l.b16 %v245
    %v310 = vunpack.c.l.b16 %v246
    %v311 = vunpack.c.l.b16 %v247
    %v312 = vunpack.c.l.b16 %v248
    %v313 = vunpack.c.l.b16 %v249
    %v314 = vpack.c.b16 %v283, %v282
    %v315 = vpack.c.b16 %v285, %v284
    %v316 = vpack.c.b16 %v287, %v286
    %v317 = vpack.c.b16 %v289, %v288
    %v318 = vpack.c.b16 %v291, %v290
    %v319 = vpack.c.b16 %v293, %v292
    %v320 = vpack.c.b16 %v295, %v294
    %v321 = vpack.c.b16 %v297, %v296
    %v322 = vpack.c.b16 %v299, %v298
    %v323 = vpack.c.b16 %v301, %v300
    %v324 = vpack.c.b16 %v303, %v302
    %v325 = vpack.c.b16 %v305, %v304
    %v326 = vpack.c.b16 %v307, %v306
    %v327 = vpack.c.b16 %v309, %v308
    %v328 = vpack.c.b16 %v311, %v310
    %v329 = vpack.c.b16 %v313, %v312
    %346 = vmatpush.bf16.msra.mxu0 %v321
    %347 = vmatpush.bf16.msra.mxu0 %v320
    %348 = vmatpush.bf16.msra.mxu0 %v319
    %349 = vmatpush.bf16.msra.mxu0 %v318
    %350 = vmatpush.bf16.msra.mxu0 %v317
    %351 = vmatpush.bf16.msra.mxu0 %v316
    %352 = vmatpush.bf16.msra.mxu0 %v315
    %353 = vmatpush.bf16.msra.mxu0 %v314
    %354 = vmatmul.bf16.gmra.mxu0 %v216
    %v355 = vpop.f32.mrf.mxu0
    %v356 = vadd.f32 0.0, %v355
    %v357 = vpop.f32.mrf.mxu0
    %v358 = vadd.f32 0.0, %v357
    %359 = vdwg.mxu0
    %360 = vmatpush.bf16.msra.mxu0 %v329
    %361 = vmatpush.bf16.msra.mxu0 %v328
    %362 = vmatpush.bf16.msra.mxu0 %v327
    %363 = vmatpush.bf16.msra.mxu0 %v326
    %364 = vmatpush.bf16.msra.mxu0 %v325
    %365 = vmatpush.bf16.msra.mxu0 %v324
    %366 = vmatpush.bf16.msra.mxu0 %v323
    %367 = vmatpush.bf16.msra.mxu0 %v322
    %368 = vmatmul.bf16.gmra.mxu0 %v217
    %v369 = vpop.f32.mrf.mxu0
    %v370 = vadd.f32 %v356, %v369
    %v371 = vpop.f32.mrf.mxu0
    %v372 = vadd.f32 %v358, %v371
    %373 = vdwg.mxu0
    %p374 = scmp.eq.s32.totalorder 0, 0
    // Predicated region
    $region14: #{tpu_custom_call.1} parent=1 // pred_check
      %p375 = pneg %p374
    $region15: #{tpu_custom_call.1} parent=1 // pred_check_branch
      %377 = sbr.rel (%p375) target = $region17
    $region16: #{tpu_custom_call.1} parent=1 // pred_region
      %378 = vst.msk [vmem:[#allocation2] sm:$0xff] %vm47, %v370
      %379 = vst.msk [vmem:[#allocation2 + $0x8] sm:$0xff] %vm47, %v372
    $region17: #{tpu_custom_call.1} parent=1 // pred_fallthru
      _
    %p380 = scmp.gt.s32.totalorder 0, 0
    // Predicated region
    $region18: #{tpu_custom_call.1} parent=1 // pred_check
      %p381 = pneg %p380
    $region19: #{tpu_custom_call.1} parent=1 // pred_check_branch
      %383 = sbr.rel (%p381) target = $region21
    $region20: #{tpu_custom_call.1} parent=1 // pred_region
      %v384 = vld [vmem:[#allocation2] sm:$0xff]
      %v385 = vld [vmem:[#allocation2 + $0x8] sm:$0xff]
      %v386 = vadd.f32 %v384, %v370
      %v387 = vadd.f32 %v385, %v372
      %388 = vst.msk [vmem:[#allocation2] sm:$0xff] %vm47, %v386
      %389 = vst.msk [vmem:[#allocation2 + $0x8] sm:$0xff] %vm47, %v387
    $region21: #{tpu_custom_call.1} parent=1 // pred_fallthru
      _
    // Predicated region
    $region22: #{tpu_custom_call.1} parent=1 // pred_check
      %p390 = pneg %p374
    $region23: #{tpu_custom_call.1} parent=1 // pred_check_branch
      %392 = sbr.rel (%p390) target = $region25
    $region24: #{tpu_custom_call.1} parent=1 // pred_region
      %v393 = vld [vmem:[#allocation2] sm:$0xff]
      %v394 = vld [vmem:[#allocation2 + $0x8] sm:$0xff]
      %395 = vst.msk [vmem:[#allocation3] sm:$0xff] %vm47, %v393
      %396 = vst.msk [vmem:[#allocation3 + $0x8] sm:$0xff] %vm47, %v394
    $region25: #{tpu_custom_call.1} parent=1 // pred_fallthru
      _
    // Predicated region
    $region26: #{tpu_custom_call.1} parent=1 // pred_check
      _
    $region27: #{tpu_custom_call.1} parent=1 // pred_check_branch
      %398 = sbr.rel (0) target = $region29
    $region28: #{tpu_custom_call.1} parent=1 // pred_region
      %400 = vsyncadd [#allocation4], 0
      %s401 = sshll.u32 [#allocation3], 4
      %s402 = int_to_ptr.vmem [resolvable:$true] %s401
      %s403 = sshll.u32 %s3, 4
      %s404 = int_to_ptr.hbm [resolvable:$true] %s403
      %409 = dma.vmem_to_hbm [thread:$0]  %s402, 256, %s404, [#allocation4], 128, 128, 8
    $region29: #{tpu_custom_call.1} parent=1 // pred_fallthru
      _
    // Predicated region
    $region30: #{tpu_custom_call.1} parent=1 // pred_check
      _
    $region31: #{tpu_custom_call.1} parent=1 // pred_check_branch
      %411 = sbr.rel (0) target = $region33
    $region32: #{tpu_custom_call.1} parent=1 // pred_region
      %413 = dma.done [#allocation4], 256
    $region33: #{tpu_custom_call.1} parent=1 // pred_fallthru
      _
    %414 = vsyncpa [#allocation4], 1

</llo_original>
